<compile_context>
chip_gen: v5e
topology: v5e:2x2
jax: 0.10.0
libtpu: 0.0.40
codegen_flags: <defaults>
</compile_context>

<pallas_src>
import functools

import jax
import jax.numpy as jnp
from jax.experimental import pallas as pl
from jax.experimental.pallas import tpu as pltpu


def _round_up(x, m):
    return ((x + m - 1) // m) * m


def _cdiv(a, b):
    return (a + b - 1) // b


def _pick_tile(padded, target, unit=128):
    """Largest divisor of `padded` that is a multiple of `unit` and <= target.

    `padded` must be a positive multiple of `unit`, so the chosen tile always
    divides it exactly (no extra padding beyond the 128-lane multiple).
    """
    m = padded // unit
    tgt = max(1, target // unit)
    best = 1
    d = 1
    while d * d <= m:
        if m % d == 0:
            for cand in (d, m // d):
                if cand <= tgt and cand > best:
                    best = cand
        d += 1
    return best * unit


# ----------------------------------------------------------------------------
# Kernels
# ----------------------------------------------------------------------------
def _fc_kernel_single_k(x_ref, w_ref, b_ref, o_ref, *, relu):
    # Whole (padded) K fits in one tile: no accumulator round-trip.
    # x_ref: (tm, tk), w_ref: (tk, tn) [weight already (K, N)], b_ref: (1, tn)
    y = jnp.dot(x_ref[...], w_ref[...], preferred_element_type=jnp.float32)
    y = y + b_ref[...]
    if relu:
        y = jnp.maximum(y, 0.0)
    o_ref[...] = y.astype(o_ref.dtype)


def _fc_kernel_multi_k(x_ref, w_ref, b_ref, o_ref, acc_ref, *, relu):
    # acc_ref: (tm, tn) f32 accumulator, resident across the K grid axis.
    k = pl.program_id(2)

    @pl.when(k == 0)
    def _():
        acc_ref[...] = jnp.zeros_like(acc_ref)

    acc_ref[...] += jnp.dot(x_ref[...], w_ref[...],
                            preferred_element_type=jnp.float32)

    @pl.when(k == pl.num_programs(2) - 1)
    def _():
        y = acc_ref[...] + b_ref[...]          # broadcast (1, tn) -> (tm, tn)
        if relu:
            y = jnp.maximum(y, 0.0)
        o_ref[...] = y.astype(o_ref.dtype)


# ----------------------------------------------------------------------------
# Wrapper
# ----------------------------------------------------------------------------
def fully_connect(x, weight, bias, *, relu=True,
                  tm=512, tn=512, tk=1024, compute_dtype="auto",
                  vmem_budget_bytes=20 * 1024 * 1024):
    """y = relu(x @ weight.T + bias)   (matches nn.Linear [+ F.relu]).

    x:      (B, in_size)
    weight: (out_size, in_size)   -- PyTorch layout (transposed once here)
    bias:   (out_size,)
    compute_dtype: "auto" (default) casts f32 operands to bf16 for the MXU
                   (f32 accumulation preserved); None keeps the input dtype.
    """
    B, K = x.shape
    N, K2 = weight.shape
    assert K == K2, "in_size mismatch"

    out_dtype = x.dtype
    if compute_dtype == "auto":
        compute_dtype = jnp.bfloat16 if x.dtype == jnp.float32 else None
    if compute_dtype is not None:
        x = x.astype(compute_dtype)
        weight = weight.astype(compute_dtype)

    op_size = jnp.dtype(x.dtype).itemsize
    out_size = jnp.dtype(out_dtype).itemsize
    sub = 16 if op_size == 2 else (32 if op_size == 1 else 8)  # sublane pack

    # ---- pad K / N only to the 128 lane multiple --------------------------
    Kp = _round_up(K, 128)
    Np = _round_up(N, 128)

    # ---- tiles: exact divisors of the 128-padded dims ---------------------
    tk = _pick_tile(Kp, min(tk, Kp))
    tn = _pick_tile(Np, min(tn, Np))

    # Batch tiling: rebalance so padding waste stays below one sublane group.
    mt = max(1, _cdiv(B, tm))
    tm = _round_up(_cdiv(B, mt), sub)
    Bp = tm * mt

    # ---- v7x megacore: ensure >= 2 parallel blocks when possible ----------
    if mt * (Np // tn) == 1 and Np >= 2 * 128:
        tn = _pick_tile(Np, Np // 2)

    # ---- keep the double-buffered working set inside the VMEM budget ------
    def _footprint(tm_, tn_, tk_):
        buf = 2 * (tm_ * tk_ + tk_ * tn_) * op_size          # x, w (dbl buf)
        buf += 2 * (tn_ * 4 + tm_ * tn_ * out_size)          # bias, out
        if Kp // tk_ > 1:
            buf += tm_ * tn_ * 4                             # f32 accumulator
        return buf

    for _ in range(32):
        if _footprint(tm, tn, tk) <= vmem_budget_bytes:
            break
        if tk > 128:
            tk = _pick_tile(Kp, tk // 2)
        elif tn > 128:
            tn = _pick_tile(Np, tn // 2)
        elif tm > sub:
            tm = max(sub, _round_up(tm // 2, sub))
            mt = _cdiv(B, tm)
            tm = _round_up(_cdiv(B, mt), sub)
            Bp = tm * mt
        else:
            break

    nt = Np // tn
    kt = Kp // tk
    grid = (mt, nt, kt)

    # ---- pad operands; pre-transpose the weight once to (K, N) ------------
    if (Bp, Kp) != (B, K):
        x = jnp.pad(x, ((0, Bp - B), (0, Kp - K)))          # zero-pad K: exact
    w_t = weight.T                                           # (K, N)
    if (Kp, Np) != (K, N):
        w_t = jnp.pad(w_t, ((0, Kp - K), (0, Np - N)))
    b2 = jnp.pad(bias.astype(jnp.float32), (0, Np - N)).reshape(1, Np)

    # ---- cost estimate: real streamed traffic ------------------------------
    cost = pl.CostEstimate(
        flops=2 * Bp * Kp * Np,
        transcendentals=0,
        bytes_accessed=(Bp * Kp * nt + Kp * Np * mt) * op_size   # x, w streams
        + Np * 4 * mt                                            # bias
        + Bp * Np * out_size,                                    # output
    )

    if kt == 1:
        kernel = functools.partial(_fc_kernel_single_k, relu=relu)
        scratch = []
    else:
        kernel = functools.partial(_fc_kernel_multi_k, relu=relu)
        scratch = [pltpu.VMEM((tm, tn), jnp.float32)]

    y = pl.pallas_call(
        kernel,
        out_shape=jax.ShapeDtypeStruct((Bp, Np), out_dtype),
        grid_spec=pltpu.PrefetchScalarGridSpec(
            num_scalar_prefetch=0,
            grid=grid,
            in_specs=[
                pl.BlockSpec((tm, tk), lambda i, j, k: (i, k)),   # x tile
                pl.BlockSpec((tk, tn), lambda i, j, k: (k, j)),   # w (K,N) tile
                pl.BlockSpec((1, tn), lambda i, j, k: (0, j)),    # bias tile
            ],
            out_specs=pl.BlockSpec((tm, tn), lambda i, j, k: (i, j)),
            scratch_shapes=scratch,
        ),
        compiler_params=pltpu.CompilerParams(
            dimension_semantics=("parallel", "parallel", "arbitrary"),
        ),
        cost_estimate=cost,
    )(x, w_t, b2)

    if (Bp, Np) != (B, N):
        y = y[:B, :N]
    return y


# ----------------------------------------------------------------------------
# Demo / self-test
# ----------------------------------------------------------------------------
if __name__ == "__main__":
    key = jax.random.PRNGKey(0)

    # --- Case 1: small FC, default bf16 compute path (relu=True) -----------
    batch, in_size, out_size = 8, 32, 64
    kx, kw, kb, key = jax.random.split(key, 4)
    bound = 1.0 / (in_size ** 0.5)
    weight = jax.random.uniform(kw, (out_size, in_size), jnp.float32,
                                minval=-bound, maxval=bound)
    bias = jax.random.uniform(kb, (out_size,), jnp.float32,
                              minval=-bound, maxval=bound)
    x = jax.random.normal(kx, (batch, in_size), jnp.float32)

    y = jax.block_until_ready(fully_connect(x, weight, bias, relu=True))
    y_ref = jnp.maximum(x @ weight.T + bias, 0.0)
    assert y.shape == (batch, out_size)
    assert jnp.allclose(y, y_ref, atol=5e-2, rtol=5e-2), "bf16 relu path mismatch"

    # Exact f32 path (relu=False), same shapes.
    y_f32 = jax.block_until_ready(
        fully_connect(x, weight, bias, relu=False, compute_dtype=None))
    assert jnp.allclose(y_f32, x @ weight.T + bias, atol=1e-5, rtol=1e-5), \
        "f32 linear path mismatch"

    # --- Case 2: multi-K-tile path (accumulator + pl.when epilogue) --------
    batch2, in2, out2 = 8, 256, 64
    kx2, kw2, kb2, key = jax.random.split(key, 4)
    bound2 = 1.0 / (in2 ** 0.5)
    weight2 = jax.random.uniform(kw2, (out2, in2), jnp.float32,
                                 minval=-bound2, maxval=bound2)
    bias2 = jax.random.uniform(kb2, (out2,), jnp.float32,
                               minval=-bound2, maxval=bound2)
    x2 = jax.random.normal(kx2, (batch2, in2), jnp.float32)

    y2 = jax.block_until_ready(
        fully_connect(x2, weight2, bias2, relu=True, tk=128,
                      compute_dtype=None))
    y2_ref = jnp.maximum(x2 @ weight2.T + bias2, 0.0)
    assert jnp.allclose(y2, y2_ref, atol=1e-5, rtol=1e-5), \
        "multi-K accumulator path mismatch"

    print("KERNEL_OK")
</pallas_src>

<mosaic_0001>
module attributes {stable_mosaic.version = 11 : i64} {
  func.func @_fc_kernel_single_k(%arg0: i32, %arg1: i32, %arg2: i32, %arg3: memref<16x128xbf16, #tpu.memory_space<vmem>>, %arg4: memref<128x128xbf16, #tpu.memory_space<vmem>>, %arg5: memref<1x128xf32, #tpu.memory_space<vmem>>, %arg6: memref<16x128xf32, #tpu.memory_space<vmem>>) attributes {dimension_semantics = [#tpu.dimension_semantics<parallel>, #tpu.dimension_semantics<parallel>, #tpu.dimension_semantics<arbitrary>], iteration_bounds = array<i64: 1, 1, 1>, scalar_prefetch = 0 : i64, scratch_operands = 0 : i64, tpu.core_type = #tpu.core_type<tc>, window_params = [{transform_indices = @transform_0, window_bounds = array<i64: 16, 128>}, {transform_indices = @transform_1, window_bounds = array<i64: 128, 128>}, {transform_indices = @transform_2, window_bounds = array<i64: 1, 128>}, {transform_indices = @transform_3, window_bounds = array<i64: 16, 128>}]} {
    %c0 = arith.constant 0 : index
    %c0_0 = arith.constant 0 : index
    %0 = vector.load %arg3[%c0, %c0_0] : memref<16x128xbf16, #tpu.memory_space<vmem>>, vector<16x128xbf16>
    %c0_1 = arith.constant 0 : index
    %c0_2 = arith.constant 0 : index
    %1 = vector.load %arg4[%c0_1, %c0_2] : memref<128x128xbf16, #tpu.memory_space<vmem>>, vector<128x128xbf16>
    %cst = arith.constant dense<0.000000e+00> : vector<16x128xf32>
    %2 = tpu.matmul %0, %1, %cst {dimension_numbers = #tpu.dot_dimension_numbers<[1], [0], [0], [1], [0, 0, 1, 1], [], []>} : vector<16x128xbf16>, vector<128x128xbf16>, vector<16x128xf32> -> vector<16x128xf32>
    %c0_3 = arith.constant 0 : index
    %c0_4 = arith.constant 0 : index
    %3 = vector.load %arg5[%c0_3, %c0_4] : memref<1x128xf32, #tpu.memory_space<vmem>>, vector<1x128xf32>
    %4 = vector.broadcast %3 : vector<1x128xf32> to vector<16x128xf32>
    %5 = arith.addf %2, %4 : vector<16x128xf32>
    %cst_5 = arith.constant 0.000000e+00 : f32
    %6 = vector.broadcast %cst_5 : f32 to vector<16x128xf32>
    %7 = arith.maximumf %5, %6 : vector<16x128xf32>
    %c0_6 = arith.constant 0 : index
    %c0_7 = arith.constant 0 : index
    %8 = vector.load %arg6[%c0_6, %c0_7] : memref<16x128xf32, #tpu.memory_space<vmem>>, vector<16x128xf32>
    tpu.vector_store %arg6[%c0_6, %c0_7], %7 {strides = array<i32>} : memref<16x128xf32, #tpu.memory_space<vmem>>, vector<16x128xf32>,
    return
  }
  func.func @transform_0(%arg0: i32, %arg1: i32, %arg2: i32) -> (i32, i32) {
    %c0_i32 = arith.constant 0 : i32
    return %arg0, %arg2 : i32, i32
  }
  func.func @transform_1(%arg0: i32, %arg1: i32, %arg2: i32) -> (i32, i32) {
    %c0_i32 = arith.constant 0 : i32
    return %arg2, %arg1 : i32, i32
  }
  func.func @transform_2(%arg0: i32, %arg1: i32, %arg2: i32) -> (i32, i32) {
    %c0_i32 = arith.constant 0 : i32
    %c0_i32_0 = arith.constant 0 : i32
    return %c0_i32, %arg1 : i32, i32
  }
  func.func @transform_3(%arg0: i32, %arg1: i32, %arg2: i32) -> (i32, i32) {
    %c0_i32 = arith.constant 0 : i32
    return %arg0, %arg1 : i32, i32
  }
}

</mosaic_0001>

<llo_original>
// kernel: tpu_custom_call.1
$region0: #{tpu_custom_call.1}
  #allocation0 [shape = 'u32[]', space=smem, size = 0x4, offset = 0x4, fixed_abs, tag = 'smem constant byte address 0x4 - core index']
  #allocation1 [shape = 'u32[72,128]{1,0:T(1,128)}', space=vmem, size = 0x9000, scoped, tag = 'internal scratch']
  %s0 = inlined_call_operand.hbm [shape: bf16[16,128], index: 0, kind: input, shape index: {}]
  %s1 = inlined_call_operand.hbm [shape: bf16[128,128], index: 1, kind: input, shape index: {}]
  %s2 = inlined_call_operand.vmem [shape: f32[1,128], index: 2, kind: input, shape index: {}]
  %s3 = inlined_call_operand.hbm [shape: f32[16,128], index: 3, kind: output, shape index: {}]
  %s4 = sld [smem:[#allocation0]]
  $region30: #{tpu_custom_call.1} parent=0
    _
  %s6 = ssub.s32 1, %s4
  %s7 = scalar_select 0, %s6, %s4
  $region1: #{tpu_custom_call.1} parent=0
    #allocation2 [shape = 'u8[4096]{0}', space=vmem, size = 0x1000, scoped, tag = 'input window, operand 0, single buffered']
    #allocation3 [shape = 's32[1]{0}', space=sflag, size = 0x4, scoped, tag = 'scoped memory for tpu_custom_call.1']
    #allocation4 [shape = 's32[1]{0}', space=sflag, size = 0x4, scoped, tag = 'scoped memory for tpu_custom_call.1']
    #allocation5 [shape = 'u8[32768]{0}', space=vmem, size = 0x8000, scoped, tag = 'input window, operand 1, single buffered']
    #allocation6 [shape = 's32[1]{0}', space=sflag, size = 0x4, scoped, tag = 'scoped memory for tpu_custom_call.1']
    #allocation7 [shape = 'u8[8192]{0}', space=vmem, size = 0x2000, scoped, tag = 'output window, operand 0, single buffered']
    %8 = vsyncpa [#allocation3], 0
    %9 = vsyncpa [#allocation6], 0
    %10 = vsyncpa [#allocation4], 0
    // Predicated region
    $region2: #{tpu_custom_call.1} parent=1 // pred_check
      _
    $region3: #{tpu_custom_call.1} parent=1 // pred_check_branch
      %12 = sbr.rel (0) target = $region5
    $region4: #{tpu_custom_call.1} parent=1 // pred_region
      %14 = vsyncadd [#allocation3], 0
      %s15 = sshll.u32 %s0, 4
      %s16 = int_to_ptr.hbm [resolvable:$true] %s15
      %s17 = sshll.u32 [#allocation2], 4
      %s18 = int_to_ptr.vmem [resolvable:$true] %s17
      %23 = dma.hbm_to_vmem [thread:$0]  %s16, 128, %s18, [#allocation3], 64, 64, 4
    $region5: #{tpu_custom_call.1} parent=1 // pred_fallthru
      _
    // Predicated region
    $region6: #{tpu_custom_call.1} parent=1 // pred_check
      _
    $region7: #{tpu_custom_call.1} parent=1 // pred_check_branch
      %25 = sbr.rel (0) target = $region9
    $region8: #{tpu_custom_call.1} parent=1 // pred_region
      %27 = vsyncadd [#allocation6], 0
      %s28 = sshll.u32 %s1, 4
      %s29 = int_to_ptr.hbm [resolvable:$true] %s28
      %s30 = sshll.u32 [#allocation5], 4
      %s31 = int_to_ptr.vmem [resolvable:$true] %s30
      %36 = dma.hbm_to_vmem [thread:$0]  %s29, 1024, %s31, [#allocation6], 64, 64, 4
    $region9: #{tpu_custom_call.1} parent=1 // pred_fallthru
      _
    // Predicated region
    $region10: #{tpu_custom_call.1} parent=1 // pred_check
      _
    $region11: #{tpu_custom_call.1} parent=1 // pred_check_branch
      %38 = sbr.rel (0) target = $region13
    $region12: #{tpu_custom_call.1} parent=1 // pred_region
      _
    $region13: #{tpu_custom_call.1} parent=1 // pred_fallthru
      _
    // Predicated region
    $region14: #{tpu_custom_call.1} parent=1 // pred_check
      _
    $region15: #{tpu_custom_call.1} parent=1 // pred_check_branch
      %40 = sbr.rel (0) target = $region17
    $region16: #{tpu_custom_call.1} parent=1 // pred_region
      %42 = dma.done [#allocation3], 128
    $region17: #{tpu_custom_call.1} parent=1 // pred_fallthru
      _
    // Predicated region
    $region18: #{tpu_custom_call.1} parent=1 // pred_check
      _
    $region19: #{tpu_custom_call.1} parent=1 // pred_check_branch
      %44 = sbr.rel (0) target = $region21
    $region20: #{tpu_custom_call.1} parent=1 // pred_region
      %46 = dma.done [#allocation6], 1024
    $region21: #{tpu_custom_call.1} parent=1 // pred_fallthru
      _
    %v47 = vld [vmem:[#allocation2] sm:$0xf]
    %v48 = vld [vmem:[#allocation2 + $0x4] sm:$0xf]
    %v49 = vld [vmem:[#allocation5] sm:$0xf]
    %v50 = vld [vmem:[#allocation5 + $0x4] sm:$0xf]
    %v51 = vld [vmem:[#allocation5 + $0x8] sm:$0xf]
    %v52 = vld [vmem:[#allocation5 + $0xc] sm:$0xf]
    %v53 = vld [vmem:[#allocation5 + $0x10] sm:$0xf]
    %v54 = vld [vmem:[#allocation5 + $0x14] sm:$0xf]
    %v55 = vld [vmem:[#allocation5 + $0x18] sm:$0xf]
    %v56 = vld [vmem:[#allocation5 + $0x1c] sm:$0xf]
    %v57 = vld [vmem:[#allocation5 + $0x20] sm:$0xf]
    %v58 = vld [vmem:[#allocation5 + $0x24] sm:$0xf]
    %v59 = vld [vmem:[#allocation5 + $0x28] sm:$0xf]
    %v60 = vld [vmem:[#allocation5 + $0x2c] sm:$0xf]
    %v61 = vld [vmem:[#allocation5 + $0x30] sm:$0xf]
    %v62 = vld [vmem:[#allocation5 + $0x34] sm:$0xf]
    %v63 = vld [vmem:[#allocation5 + $0x38] sm:$0xf]
    %v64 = vld [vmem:[#allocation5 + $0x3c] sm:$0xf]
    %v65 = vld [vmem:[%s2] sm:$0x1]
    %v67 = vperm.slane %v65, 0
    %v71 = vunpack.c.l.b16 %v47
    %v72 = vunpack.c.l.b16 %v48
    %v73 = vpack.c.b16 %v72, %v71
    %v91 = vunpack.c.l.b16 %v49
    %v92 = vunpack.c.l.b16 %v50
    %v93 = vunpack.c.l.b16 %v51
    %v94 = vunpack.c.l.b16 %v52
    %v95 = vunpack.c.l.b16 %v53
    %v96 = vunpack.c.l.b16 %v54
    %v97 = vunpack.c.l.b16 %v55
    %v98 = vunpack.c.l.b16 %v56
    %v99 = vunpack.c.l.b16 %v57
    %v100 = vunpack.c.l.b16 %v58
    %v101 = vunpack.c.l.b16 %v59
    %v102 = vunpack.c.l.b16 %v60
    %v103 = vunpack.c.l.b16 %v61
    %v104 = vunpack.c.l.b16 %v62
    %v105 = vunpack.c.l.b16 %v63
    %v106 = vunpack.c.l.b16 %v64
    %v107 = vpack.c.b16 %v92, %v91
    %v108 = vpack.c.b16 %v94, %v93
    %v109 = vpack.c.b16 %v96, %v95
    %v110 = vpack.c.b16 %v98, %v97
    %v111 = vpack.c.b16 %v100, %v99
    %v112 = vpack.c.b16 %v102, %v101
    %v113 = vpack.c.b16 %v104, %v103
    %v114 = vpack.c.b16 %v106, %v105
    %123 = vmatpush.bf16.msra.mxu0 %v114
    %124 = vmatpush.bf16.msra.mxu0 %v113
    %125 = vmatpush.bf16.msra.mxu0 %v112
    %126 = vmatpush.bf16.msra.mxu0 %v111
    %127 = vmatpush.bf16.msra.mxu0 %v110
    %128 = vmatpush.bf16.msra.mxu0 %v109
    %129 = vmatpush.bf16.msra.mxu0 %v108
    %130 = vmatpush.bf16.msra.mxu0 %v107
    %131 = vmatmul.bf16.gmra.mxu0 %v73
    %v132 = vpop.f32.mrf.mxu0
    %v133 = vadd.f32 %v67, %v132
    %v134 = vpop.f32.mrf.mxu0
    %v135 = vadd.f32 %v67, %v134
    %136 = vdwg.mxu0
    %v137 = vmax.f32 %v133, 0.0
    %v138 = vmax.f32 %v135, 0.0
    %139 = vst [vmem:[#allocation7] sm:$0xff] %v137
    %140 = vst [vmem:[#allocation7 + $0x8] sm:$0xff] %v138
    // Predicated region
    $region22: #{tpu_custom_call.1} parent=1 // pred_check
      _
    $region23: #{tpu_custom_call.1} parent=1 // pred_check_branch
      %142 = sbr.rel (0) target = $region25
    $region24: #{tpu_custom_call.1} parent=1 // pred_region
      %144 = vsyncadd [#allocation4], 0
      %s145 = sshll.u32 [#allocation7], 4
      %s146 = int_to_ptr.vmem [resolvable:$true] %s145
      %s147 = sshll.u32 %s3, 4
      %s148 = int_to_ptr.hbm [resolvable:$true] %s147
      %153 = dma.vmem_to_hbm [thread:$0]  %s146, 256, %s148, [#allocation4], 128, 128, 8
    $region25: #{tpu_custom_call.1} parent=1 // pred_fallthru
      _
    // Predicated region
    $region26: #{tpu_custom_call.1} parent=1 // pred_check
      _
    $region27: #{tpu_custom_call.1} parent=1 // pred_check_branch
      %155 = sbr.rel (0) target = $region29
    $region28: #{tpu_custom_call.1} parent=1 // pred_region
      %157 = dma.done [#allocation4], 256
    $region29: #{tpu_custom_call.1} parent=1 // pred_fallthru
      _
    %158 = vsyncpa [#allocation3], 1
    %159 = vsyncpa [#allocation6], 1
    %160 = vsyncpa [#allocation4], 1

</llo_original>
